<compile_context>
chip_gen: v7x
topology: tpu7x:2x2x1
jax: 0.10.0
libtpu: 0.0.40
codegen_flags: <defaults>
</compile_context>

<pallas_src>
import jax
import jax.numpy as jnp
import numpy as np
from jax.experimental import pallas as pl
from jax.experimental.pallas import tpu as pltpu

_LANES = 128
_SUBLANES = 8
_INT8_SUBLANES = 32   # int8 operands use (32, 128) tiling


def _round_up(x, m):
    return -(-x // m) * m


def _edge_channel_loss_kernel(fe_ref, tgt_ref, loss_ref, acc_ref):
    """Accumulate CE-loss / accuracy partial sums for one (block_rows, 128) tile.

    fe_ref  : (block_rows, 128) f32  — fe = logit[:, 1] - logit[:, 0]
    tgt_ref : (block_rows, 128) int8 — 0: different group, 1: same group, 2: pad
    loss_ref, acc_ref : (8, 128) f32 — resident per-core accumulators (row 0 used)
    """
    step = pl.program_id(1)

    @pl.when(step == 0)
    def _init():
        loss_ref[...] = jnp.zeros_like(loss_ref)
        acc_ref[...] = jnp.zeros_like(acc_ref)

    fe = fe_ref[...]
    s = tgt_ref[...].astype(jnp.int32)
    same = s == 1              # CE target class 1 (same-group edge)
    valid = s < 2              # padded lanes carry s == 2 (tail + alignment pad)

    # Stable 2-class cross entropy via softplus on fe:
    #   target==1: log(1 + exp(l0 - l1)) = softplus(-fe)
    #   target==0: log(1 + exp(l1 - l0)) = softplus(+fe)
    x = jnp.where(same, -fe, fe)
    sp = jnp.maximum(x, 0.0) + jnp.log(1.0 + jnp.exp(-jnp.abs(x)))
    per_edge = jnp.where(valid, sp, jnp.float32(0.0))

    # argmax over the 2 channels (ties -> class 0) vs target; padding excluded.
    correct = jnp.where(valid & ((fe > 0.0) == same),
                        jnp.float32(1.0), jnp.float32(0.0))

    # Per-lane partial sums: axis-0 (sublane) reduce only — no cross-lane XLU
    # reduce and no (1, 1) read-modify-write in the steady state.
    loss_ref[0:1, :] += jnp.sum(per_edge, axis=0, keepdims=True)
    acc_ref[0:1, :] += jnp.sum(correct, axis=0, keepdims=True)


def edge_channel_loss_pallas(edge_pred, group_i, group_j, *, block_rows=1024):
    """edge_pred: (E, 2) logits; group_i/group_j: (E,) int group labels.

    Returns (loss, accuracy, fe) with fe = edge_pred[:, 1] - edge_pred[:, 0],
    loss = mean 2-class CE against target = (group_i == group_j).
    """
    E = int(edge_pred.shape[0])
    if E == 0:
        # Degenerate empty-graph branch of the original module.
        return jnp.float32(0.0), jnp.float32(1.0), jnp.zeros((0,), jnp.float32)

    pred = edge_pred.astype(jnp.float32)
    # fe is both a required module output and the only per-edge quantity the CE
    # loss / accuracy depend on (CE = softplus(+-fe)); feeding it instead of the
    # two logit channels removes the channel-split pre-pass and halves the
    # kernel's per-edge f32 reads.
    fe = pred[:, 1] - pred[:, 0]                                   # (E,)

    # 3-state edge target (int8): 1 same-group, 0 different-group, 2 padding.
    tgt = (group_i == group_j).astype(jnp.int8)                    # (E,)

    # Tile geometry: 128 lanes per row; block_rows rows per grid step, kept a
    # multiple of 32 so the int8 target tile respects its (32, 128) tiling.
    rows = -(-E // _LANES)
    block_rows = max(_INT8_SUBLANES,
                     (int(block_rows) // _INT8_SUBLANES) * _INT8_SUBLANES)
    block_rows = min(block_rows, _round_up(rows, _INT8_SUBLANES))
    num_blocks = -(-rows // block_rows)
    num_cores = min(2, num_blocks)          # leading 'parallel' axis (v7x megacore)
    bpc = -(-num_blocks // num_cores)       # blocks per core
    r_pad = num_cores * bpc * block_rows
    e_pad = r_pad * _LANES

    # These pads fuse into the fusions producing fe / tgt; edge_pred itself is
    # never padded or transposed in HBM.
    fe2d = jnp.pad(fe, (0, e_pad - E)).reshape(r_pad, _LANES)
    tgt2d = jnp.pad(tgt, (0, e_pad - E), constant_values=2).reshape(r_pad, _LANES)

    tile_spec = pl.BlockSpec((block_rows, _LANES), lambda p, i: (p * bpc + i, 0))
    accum_spec = pl.BlockSpec((_SUBLANES, _LANES), lambda p, i: (p, 0))

    loss_parts, acc_parts = pl.pallas_call(
        _edge_channel_loss_kernel,
        out_shape=(
            jax.ShapeDtypeStruct((num_cores * _SUBLANES, _LANES), jnp.float32),
            jax.ShapeDtypeStruct((num_cores * _SUBLANES, _LANES), jnp.float32),
        ),
        grid=(num_cores, bpc),
        in_specs=[tile_spec, tile_spec],
        out_specs=(accum_spec, accum_spec),
        compiler_params=pltpu.CompilerParams(
            # p axis: independent per-core partials -> "parallel";
            # i axis: carries the running accumulation -> "arbitrary" (last).
            dimension_semantics=("parallel", "arbitrary"),
        ),
    )(fe2d, tgt2d)

    inv_e = jnp.float32(1.0 / E)             # reduction='mean' over the global E
    loss = jnp.sum(loss_parts) * inv_e
    acc = jnp.sum(acc_parts) * inv_e
    return loss, acc, fe


def edge_channel_loss_forward(edge_pred, edge_index, group):
    """Mimics EdgeChannelLoss.forward for a single 'gpu' entry (ngpus=1),
    loss='CE', reduction='mean'."""
    # TODO(synk): the 'MM' (MultiMarginLoss) config branch is not implemented.
    ngpus = 1
    src, dst = edge_index
    group_i = group[src]
    group_j = group[dst]
    loss, acc, fe = edge_channel_loss_pallas(edge_pred, group_i, group_j)
    # TODO(synk): form_clusters_new / filter_compton / complete_graph /
    # assign_clusters_UF / DBSCAN_cluster_metrics2 (ARI/AMI/SBD/purity/eff) are
    # data-dependent CPU/sklearn graph code with no Pallas equivalent.
    return {
        'ARI': 0.0, 'AMI': 0.0, 'SBD': 0.0, 'purity': 0.0, 'efficiency': 0.0,
        'accuracy': acc / ngpus,
        'loss': loss / ngpus,
        'edge_count': int(edge_index.shape[1]),
        'fe': fe,
    }


def _reference(edge_pred, group_i, group_j):
    tgt = (group_i == group_j).astype(jnp.int32)
    lse = jax.nn.logsumexp(edge_pred.astype(jnp.float32), axis=1)
    l_tgt = jnp.take_along_axis(edge_pred.astype(jnp.float32),
                                tgt[:, None], axis=1)[:, 0]
    loss = jnp.mean(lse - l_tgt)
    acc = jnp.mean((jnp.argmax(edge_pred, axis=1) == tgt).astype(jnp.float32))
    fe = edge_pred[:, 1] - edge_pred[:, 0]
    return loss, acc, fe


if __name__ == "__main__":
    key = jax.random.PRNGKey(0)
    k_grp, k_pred = jax.random.split(key)

    # --- Test 1: module-shaped small example --------------------------------
    # Synthetic clusters: 16 clusters split into 2 batches of 8 each.
    N = 16
    batch = np.repeat(np.arange(2), 8)                      # (16,)
    group = jax.random.randint(k_grp, (N,), 0, 4, dtype=jnp.int32)

    # complete_graph: all ordered pairs (i, j), i != j, within the same batch.
    ii, jj = np.meshgrid(np.arange(N), np.arange(N), indexing='ij')
    mask = (batch[ii] == batch[jj]) & (ii != jj)
    edge_index = jnp.asarray(np.stack([ii[mask], jj[mask]]), dtype=jnp.int32)
    E = edge_index.shape[1]                                 # 2 * 8 * 7 = 112 edges

    edge_pred = jax.random.normal(k_pred, (E, 2), dtype=jnp.float32)

    result = edge_channel_loss_forward(edge_pred, edge_index, group)
    jax.block_until_ready(result['loss'])
    jax.block_until_ready(result['fe'])

    ref_loss, ref_acc, ref_fe = _reference(
        edge_pred, group[edge_index[0]], group[edge_index[1]])
    assert jnp.allclose(result['loss'], ref_loss, atol=1e-4, rtol=1e-4)
    assert jnp.allclose(result['accuracy'], ref_acc, atol=1e-4, rtol=1e-4)
    assert jnp.allclose(result['fe'], ref_fe, atol=1e-4, rtol=1e-4)

    # --- Test 2: tiled grid + 2-core split + tail masking --------------------
    # E2=12000 -> 94 rows -> 3 blocks of 32 rows -> 2 cores x 2 blocks where the
    # last block is entirely padding; exercises accumulation, the uneven core
    # split and the 3-state padding mask.
    k1, k2, k3 = jax.random.split(jax.random.PRNGKey(1), 3)
    E2 = 12000
    edge_pred2 = jax.random.normal(k1, (E2, 2), dtype=jnp.float32)
    gi2 = jax.random.randint(k2, (E2,), 0, 5, dtype=jnp.int32)
    gj2 = jax.random.randint(k3, (E2,), 0, 5, dtype=jnp.int32)
    loss2, acc2, fe2 = edge_channel_loss_pallas(edge_pred2, gi2, gj2,
                                                block_rows=32)
    jax.block_until_ready(fe2)
    rl2, ra2, rf2 = _reference(edge_pred2, gi2, gj2)
    assert jnp.allclose(loss2, rl2, atol=1e-4, rtol=1e-4)
    assert jnp.allclose(acc2, ra2, atol=1e-4, rtol=1e-4)
    assert jnp.allclose(fe2, rf2, atol=1e-4, rtol=1e-4)

    # --- Test 3: exactly block-aligned (no padding anywhere) -----------------
    k4, k5, k6 = jax.random.split(jax.random.PRNGKey(2), 3)
    E3 = 2 * 32 * 128                                       # 8192 edges, 1 block/core
    edge_pred3 = jax.random.normal(k4, (E3, 2), dtype=jnp.float32)
    gi3 = jax.random.randint(k5, (E3,), 0, 3, dtype=jnp.int32)
    gj3 = jax.random.randint(k6, (E3,), 0, 3, dtype=jnp.int32)
    loss3, acc3, fe3 = edge_channel_loss_pallas(edge_pred3, gi3, gj3,
                                                block_rows=32)
    jax.block_until_ready(fe3)
    rl3, ra3, rf3 = _reference(edge_pred3, gi3, gj3)
    assert jnp.allclose(loss3, rl3, atol=1e-4, rtol=1e-4)
    assert jnp.allclose(acc3, ra3, atol=1e-4, rtol=1e-4)
    assert jnp.allclose(fe3, rf3, atol=1e-4, rtol=1e-4)

    print("KERNEL_OK")
</pallas_src>

<mosaic_0001>
module attributes {stable_mosaic.version = 11 : i64} {
  func.func @_edge_channel_loss_kernel(%arg0: i32, %arg1: i32, %arg2: memref<32x128xf32, #tpu.memory_space<vmem>>, %arg3: memref<32x128xi8, #tpu.memory_space<vmem>>, %arg4: memref<8x128xf32, #tpu.memory_space<vmem>>, %arg5: memref<8x128xf32, #tpu.memory_space<vmem>>) attributes {dimension_semantics = [#tpu.dimension_semantics<parallel>, #tpu.dimension_semantics<arbitrary>], iteration_bounds = array<i64: 1, 1>, scalar_prefetch = 0 : i64, scratch_operands = 0 : i64, tpu.core_type = #tpu.core_type<tc>, window_params = [{transform_indices = @transform_0, window_bounds = array<i64: 32, 128>}, {transform_indices = @transform_1, window_bounds = array<i64: 32, 128>}, {transform_indices = @transform_2, window_bounds = array<i64: 8, 128>}, {transform_indices = @transform_3, window_bounds = array<i64: 8, 128>}]} {
    %c0_i32 = arith.constant 0 : i32
    %0 = arith.cmpi eq, %arg1, %c0_i32 : i32
    %1 = arith.extui %0 : i1 to i32
    %c0_i32_0 = arith.constant 0 : i32
    %2 = arith.cmpi ne, %1, %c0_i32_0 : i32
    scf.if %2 {
      %cst_22 = arith.constant 0.000000e+00 : f32
      %43 = vector.broadcast %cst_22 : f32 to vector<8x128xf32>
      %c0_23 = arith.constant 0 : index
      %c0_24 = arith.constant 0 : index
      %44 = vector.load %arg4[%c0_23, %c0_24] : memref<8x128xf32, #tpu.memory_space<vmem>>, vector<8x128xf32>
      tpu.vector_store %arg4[%c0_23, %c0_24], %43 {strides = array<i32>} : memref<8x128xf32, #tpu.memory_space<vmem>>, vector<8x128xf32>,
      %cst_25 = arith.constant 0.000000e+00 : f32
      %45 = vector.broadcast %cst_25 : f32 to vector<8x128xf32>
      %c0_26 = arith.constant 0 : index
      %c0_27 = arith.constant 0 : index
      %46 = vector.load %arg5[%c0_26, %c0_27] : memref<8x128xf32, #tpu.memory_space<vmem>>, vector<8x128xf32>
      tpu.vector_store %arg5[%c0_26, %c0_27], %45 {strides = array<i32>} : memref<8x128xf32, #tpu.memory_space<vmem>>, vector<8x128xf32>,
    } else {
    }
    %c0 = arith.constant 0 : index
    %c0_1 = arith.constant 0 : index
    %3 = vector.load %arg2[%c0, %c0_1] : memref<32x128xf32, #tpu.memory_space<vmem>>, vector<32x128xf32>
    %c0_2 = arith.constant 0 : index
    %c0_3 = arith.constant 0 : index
    %4 = vector.load %arg3[%c0_2, %c0_3] : memref<32x128xi8, #tpu.memory_space<vmem>>, vector<32x128xi8>
    %5 = arith.extsi %4 : vector<32x128xi8> to vector<32x128xi32>
    %c1_i32 = arith.constant 1 : i32
    %6 = vector.broadcast %c1_i32 : i32 to vector<32x128xi32>
    %7 = arith.cmpi eq, %5, %6 : vector<32x128xi32>
    %c2_i32 = arith.constant 2 : i32
    %8 = vector.broadcast %c2_i32 : i32 to vector<32x128xi32>
    %9 = arith.cmpi slt, %5, %8 : vector<32x128xi32>
    %cst = arith.constant 0.000000e+00 : f32
    %10 = vector.broadcast %cst : f32 to vector<32x128xf32>
    %11 = arith.subf %10, %3 : vector<32x128xf32>
    %12 = arith.select %7, %11, %3 : vector<32x128xi1>, vector<32x128xf32>
    %cst_4 = arith.constant 0.000000e+00 : f32
    %13 = vector.broadcast %cst_4 : f32 to vector<32x128xf32>
    %14 = arith.maximumf %12, %13 : vector<32x128xf32>
    %15 = math.absf %12 : vector<32x128xf32>
    %cst_5 = arith.constant 0.000000e+00 : f32
    %16 = vector.broadcast %cst_5 : f32 to vector<32x128xf32>
    %17 = arith.subf %16, %15 : vector<32x128xf32>
    %18 = math.exp %17 : vector<32x128xf32>
    %cst_6 = arith.constant 1.000000e+00 : f32
    %19 = vector.broadcast %cst_6 : f32 to vector<32x128xf32>
    %20 = arith.addf %19, %18 : vector<32x128xf32>
    %21 = math.log %20 : vector<32x128xf32>
    %22 = arith.addf %14, %21 : vector<32x128xf32>
    %cst_7 = arith.constant 0.000000e+00 : f32
    %23 = vector.broadcast %cst_7 : f32 to vector<32x128xf32>
    %24 = arith.select %9, %22, %23 : vector<32x128xi1>, vector<32x128xf32>
    %cst_8 = arith.constant 0.000000e+00 : f32
    %25 = vector.broadcast %cst_8 : f32 to vector<32x128xf32>
    %26 = arith.cmpf ogt, %3, %25 : vector<32x128xf32>
    %27 = arith.xori %26, %7 : vector<32x128xi1>
    %cst_9 = arith.constant dense<true> : vector<32x128xi1>
    %28 = arith.xori %27, %cst_9 : vector<32x128xi1>
    %29 = arith.andi %9, %28 : vector<32x128xi1>
    %cst_10 = arith.constant 1.000000e+00 : f32
    %cst_11 = arith.constant 0.000000e+00 : f32
    %30 = vector.broadcast %cst_10 : f32 to vector<32x128xf32>
    %31 = vector.broadcast %cst_11 : f32 to vector<32x128xf32>
    %32 = arith.select %29, %30, %31 : vector<32x128xi1>, vector<32x128xf32>
    %c0_12 = arith.constant 0 : index
    %c0_13 = arith.constant 0 : index
    %33 = vector.load %arg4[%c0_12, %c0_13] : memref<8x128xf32, #tpu.memory_space<vmem>>, vector<1x128xf32>
    %cst_14 = arith.constant dense<0.000000e+00> : vector<128xf32>
    %34 = vector.multi_reduction <add>, %24, %cst_14 [0] : vector<32x128xf32> to vector<128xf32>
    %35 = vector.shape_cast %34 : vector<128xf32> to vector<1x128xf32>
    %36 = arith.addf %33, %35 : vector<1x128xf32>
    %c0_15 = arith.constant 0 : index
    %c0_16 = arith.constant 0 : index
    %37 = vector.load %arg4[%c0_15, %c0_16] : memref<8x128xf32, #tpu.memory_space<vmem>>, vector<1x128xf32>
    tpu.vector_store %arg4[%c0_15, %c0_16], %36 {strides = array<i32>} : memref<8x128xf32, #tpu.memory_space<vmem>>, vector<1x128xf32>,
    %c0_17 = arith.constant 0 : index
    %c0_18 = arith.constant 0 : index
    %38 = vector.load %arg5[%c0_17, %c0_18] : memref<8x128xf32, #tpu.memory_space<vmem>>, vector<1x128xf32>
    %cst_19 = arith.constant dense<0.000000e+00> : vector<128xf32>
    %39 = vector.multi_reduction <add>, %32, %cst_19 [0] : vector<32x128xf32> to vector<128xf32>
    %40 = vector.shape_cast %39 : vector<128xf32> to vector<1x128xf32>
    %41 = arith.addf %38, %40 : vector<1x128xf32>
    %c0_20 = arith.constant 0 : index
    %c0_21 = arith.constant 0 : index
    %42 = vector.load %arg5[%c0_20, %c0_21] : memref<8x128xf32, #tpu.memory_space<vmem>>, vector<1x128xf32>
    tpu.vector_store %arg5[%c0_20, %c0_21], %41 {strides = array<i32>} : memref<8x128xf32, #tpu.memory_space<vmem>>, vector<1x128xf32>,
    return
  }
  func.func @transform_0(%arg0: i32, %arg1: i32) -> (i32, i32) {
    %c1_i32 = arith.constant 1 : i32
    %0 = arith.muli %arg0, %c1_i32 : i32
    %1 = arith.addi %0, %arg1 : i32
    %c0_i32 = arith.constant 0 : i32
    %c0_i32_0 = arith.constant 0 : i32
    return %1, %c0_i32 : i32, i32
  }
  func.func @transform_1(%arg0: i32, %arg1: i32) -> (i32, i32) {
    %c1_i32 = arith.constant 1 : i32
    %0 = arith.muli %arg0, %c1_i32 : i32
    %1 = arith.addi %0, %arg1 : i32
    %c0_i32 = arith.constant 0 : i32
    %c0_i32_0 = arith.constant 0 : i32
    return %1, %c0_i32 : i32, i32
  }
  func.func @transform_2(%arg0: i32, %arg1: i32) -> (i32, i32) {
    %c0_i32 = arith.constant 0 : i32
    %c0_i32_0 = arith.constant 0 : i32
    return %arg0, %c0_i32 : i32, i32
  }
  func.func @transform_3(%arg0: i32, %arg1: i32) -> (i32, i32) {
    %c0_i32 = arith.constant 0 : i32
    %c0_i32_0 = arith.constant 0 : i32
    return %arg0, %c0_i32 : i32, i32
  }
}

</mosaic_0001>

<llo_original>
// kernel: tpu_custom_call.1
$region0: #{tpu_custom_call.1}
  #allocation0 [shape = 'u32[]', space=smem, size = 0x4, offset = 0x4, fixed_abs, tag = 'smem constant byte address 0x4 - core index']
  #allocation1 [shape = 'u32[144,128]{1,0:T(1,128)}', space=vmem, size = 0x12000, scoped, tag = 'internal scratch']
  %s0 = inlined_call_operand.hbm [shape: f32[32,128], index: 0, kind: input, shape index: {}]
  %s1 = inlined_call_operand.hbm [shape: s8[32,128], index: 1, kind: input, shape index: {}]
  %s2 = inlined_call_operand.hbm [shape: f32[8,128], index: 2, kind: output, shape index: {0}]
  %s3 = inlined_call_operand.hbm [shape: f32[8,128], index: 3, kind: output, shape index: {1}]
  %4 = xla_tuple %s2, %s3
  %s5 = sld [smem:[#allocation0]]
  $region38: #{tpu_custom_call.1} parent=0
    _
  %s7 = ssub.s32 1, %s5
  %s8 = scalar_select 0, %s7, %s5
  $region1: #{tpu_custom_call.1} parent=0
    #allocation2 [shape = 'u8[16384]{0}', space=vmem, size = 0x4000, scoped, tag = 'input window, operand 0, single buffered']
    #allocation3 [shape = 's32[1]{0}', space=sflag, size = 0x4, scoped, tag = 'scoped memory for tpu_custom_call.1']
    #allocation4 [shape = 's32[1]{0}', space=sflag, size = 0x4, scoped, tag = 'scoped memory for tpu_custom_call.1']
    #allocation5 [shape = 'u8[4096]{0}', space=vmem, size = 0x1000, scoped, tag = 'input window, operand 1, single buffered']
    #allocation6 [shape = 's32[1]{0}', space=sflag, size = 0x4, scoped, tag = 'scoped memory for tpu_custom_call.1']
    #allocation7 [shape = 'u8[4096]{0}', space=vmem, size = 0x1000, scoped, tag = 'output window, operand 0, single buffered']
    #allocation8 [shape = 'u8[4096]{0}', space=vmem, size = 0x1000, scoped, tag = 'output window, operand 1, single buffered']
    #allocation9 [shape = 's32[1]{0}', space=sflag, size = 0x4, scoped, tag = 'scoped memory for tpu_custom_call.1']
    %9 = vsyncpa [#allocation3], 0
    %10 = vsyncpa [#allocation6], 0
    %11 = vsyncpa [#allocation4], 0
    %12 = vsyncpa [#allocation9], 0
    // Predicated region
    $region2: #{tpu_custom_call.1} parent=1 // pred_check
      _
    $region3: #{tpu_custom_call.1} parent=1 // pred_check_branch
      %14 = sbr.rel (0) target = $region5
    $region4: #{tpu_custom_call.1} parent=1 // pred_region
      %s15 = sadd.s32 0, 0
      %s16 = smul.u32 4, %s15
      %s18 = ssub.s32 512, 512
      %19 = vsyncadd [#allocation3], %s18
      %s20 = smul.addr %s16, 128
      %s21 = scalar_lea.hbm %s0, %s20
      %s22 = sshll.u32 [#allocation2], 4
      %s23 = int_to_ptr.vmem [resolvable:$true] %s22
      %28 = dma.hbm_to_vmem [thread:$0]  %s21, 512, %s23, [#allocation3], 128, 128, 8
    $region5: #{tpu_custom_call.1} parent=1 // pred_fallthru
      _
    // Predicated region
    $region6: #{tpu_custom_call.1} parent=1 // pred_check
      _
    $region7: #{tpu_custom_call.1} parent=1 // pred_check_branch
      %30 = sbr.rel (0) target = $region9
    $region8: #{tpu_custom_call.1} parent=1 // pred_region
      %s31 = sadd.s32 0, 0
      %s33 = ssub.s32 128, 128
      %34 = vsyncadd [#allocation6], %s33
      %s35 = smul.addr %s31, 128
      %s36 = scalar_lea.hbm %s1, %s35
      %s38 = sshll.u32 [#allocation5], 4
      %s39 = int_to_ptr.vmem [resolvable:$true] %s38
      %41 = dma.hbm_to_vmem [thread:$0]  %s36, 128, %s39, [#allocation6]
    $region9: #{tpu_custom_call.1} parent=1 // pred_fallthru
      _
    // Predicated region
    $region10: #{tpu_custom_call.1} parent=1 // pred_check
      _
    $region11: #{tpu_custom_call.1} parent=1 // pred_check_branch
      %43 = sbr.rel (0) target = $region13
    $region12: #{tpu_custom_call.1} parent=1 // pred_region
      %44 = dma.done [#allocation3], 512
    $region13: #{tpu_custom_call.1} parent=1 // pred_fallthru
      _
    // Predicated region
    $region14: #{tpu_custom_call.1} parent=1 // pred_check
      _
    $region15: #{tpu_custom_call.1} parent=1 // pred_check_branch
      %46 = sbr.rel (0) target = $region17
    $region16: #{tpu_custom_call.1} parent=1 // pred_region
      %47 = dma.done [#allocation6], 128
    $region17: #{tpu_custom_call.1} parent=1 // pred_fallthru
      _
    %s48 = sadd.s32 0, 0
    %s49 = smul.u32 4, %s48
    %s50 = sadd.s32 0, 0
    %p51 = scmp.eq.s32.totalorder 0, 0
    // Predicated region
    $region18: #{tpu_custom_call.1} parent=1 // pred_check
      %p52 = pneg %p51
    $region19: #{tpu_custom_call.1} parent=1 // pred_check_branch
      %54 = sbr.rel (%p52) target = $region21
    $region20: #{tpu_custom_call.1} parent=1 // pred_region
      %55 = vst [vmem:[#allocation7] sm:$0xff] 0.0
      %56 = vst [vmem:[#allocation8] sm:$0xff] 0.0
    $region21: #{tpu_custom_call.1} parent=1 // pred_fallthru
      _
    %v57 = vld [vmem:[#allocation2] sm:$0xff]
    %v58 = vld [vmem:[#allocation2 + $0x8] sm:$0xff]
    %v59 = vld [vmem:[#allocation2 + $0x10] sm:$0xff]
    %v60 = vld [vmem:[#allocation2 + $0x18] sm:$0xff]
    %v61 = vld [vmem:[#allocation5] sm:$0xff]
    %v62 = vunpack.c.0.s8 %v61
    %v63 = vunpack.c.1.s8 %v61
    %v64 = vunpack.c.2.s8 %v61
    %v65 = vunpack.c.3.s8 %v61
    %vm66 = vcmp.eq.s32.totalorder %v62, 1
    %vm67 = vcmp.eq.s32.totalorder %v63, 1
    %vm68 = vcmp.eq.s32.totalorder %v64, 1
    %vm69 = vcmp.eq.s32.totalorder %v65, 1
    %vm70 = vcmp.lt.s32.totalorder %v62, 2
    %vm71 = vcmp.lt.s32.totalorder %v63, 2
    %vm72 = vcmp.lt.s32.totalorder %v64, 2
    %vm73 = vcmp.lt.s32.totalorder %v65, 2
    %v74 = vsub.f32 0.0, %v57
    %v75 = vsub.f32 0.0, %v58
    %v76 = vsub.f32 0.0, %v59
    %v77 = vsub.f32 0.0, %v60
    %v78 = vsel %vm66, %v74, %v57
    %v79 = vsel %vm67, %v75, %v58
    %v80 = vsel %vm68, %v76, %v59
    %v81 = vsel %vm69, %v77, %v60
    %v82 = vmax.f32 %v78, 0.0
    %v83 = vmax.f32 %v79, 0.0
    %v84 = vmax.f32 %v80, 0.0
    %v85 = vmax.f32 %v81, 0.0
    %v86 = vand.u32 2147483647, %v78
    %v87 = vand.u32 2147483647, %v79
    %v88 = vand.u32 2147483647, %v80
    %v89 = vand.u32 2147483647, %v81
    %v90 = vsub.f32 0.0, %v86
    %v91 = vsub.f32 0.0, %v87
    %v92 = vsub.f32 0.0, %v88
    %v93 = vsub.f32 0.0, %v89
    %v94 = vmul.f32 %v90, 1.442695
    %v95 = vpow.pop %v94
    %v96 = vmul.f32 %v91, 1.442695
    %v97 = vpow.pop %v96
    %v98 = vmul.f32 %v92, 1.442695
    %v99 = vpow.pop %v98
    %v100 = vmul.f32 %v93, 1.442695
    %v101 = vpow.pop %v100
    %v102 = vadd.f32 %v95, 1.0
    %v103 = vadd.f32 %v97, 1.0
    %v104 = vadd.f32 %v99, 1.0
    %v105 = vadd.f32 %v101, 1.0
    %v106 = vlog2.pop %v102
    %v107 = vmul.f32 %v106, 0.6931472
    %v108 = vlog2.pop %v103
    %v109 = vmul.f32 %v108, 0.6931472
    %v110 = vlog2.pop %v104
    %v111 = vmul.f32 %v110, 0.6931472
    %v112 = vlog2.pop %v105
    %v113 = vmul.f32 %v112, 0.6931472
    %v114 = vadd.f32 %v82, %v107
    %v115 = vadd.f32 %v83, %v109
    %v116 = vadd.f32 %v84, %v111
    %v117 = vadd.f32 %v85, %v113
    %v118 = vsel %vm70, %v114, 0.0
    %v119 = vsel %vm71, %v115, 0.0
    %v120 = vsel %vm72, %v116, 0.0
    %v121 = vsel %vm73, %v117, 0.0
    %vm122 = vcmp.gt.f32.partialorder %v57, 0.0
    %vm123 = vcmp.gt.f32.partialorder %v58, 0.0
    %vm124 = vcmp.gt.f32.partialorder %v59, 0.0
    %vm125 = vcmp.gt.f32.partialorder %v60, 0.0
    %vm126 = vmxor %vm122, %vm66
    %vm127 = vmxor %vm123, %vm67
    %vm128 = vmxor %vm124, %vm68
    %vm129 = vmxor %vm125, %vm69
    %vm130 = vmxor %vm126, 1
    %vm131 = vmxor %vm127, 1
    %vm132 = vmxor %vm128, 1
    %vm133 = vmxor %vm129, 1
    %vm134 = vmand %vm70, %vm130
    %vm135 = vmand %vm71, %vm131
    %vm136 = vmand %vm72, %vm132
    %vm137 = vmand %vm73, %vm133
    %v138 = vsel %vm134, 1.0, 0.0
    %v139 = vsel %vm135, 1.0, 0.0
    %v140 = vsel %vm136, 1.0, 0.0
    %v141 = vsel %vm137, 1.0, 0.0
    %v142 = vld [vmem:[#allocation7] sm:$0x1]
    %v143 = vadd.f32 %v118, %v119
    %v144 = vadd.f32 %v143, %v120
    %v145 = vadd.f32 %v144, %v121
    %v146 = vrot.slane %v145, 4
    %v147 = vadd.f32 %v145, %v146
    %v148 = vrot.slane %v147, 2
    %v149 = vadd.f32 %v147, %v148
    %v150 = vrot.slane %v149, 1
    %v151 = vadd.f32 %v149, %v150
    %v152 = vadd.f32 %v142, %v151
    %153 = vst [vmem:[#allocation7] sm:$0x1] %v152
    %v154 = vld [vmem:[#allocation8] sm:$0x1]
    %v155 = vadd.f32 %v138, %v139
    %v156 = vadd.f32 %v155, %v140
    %v157 = vadd.f32 %v156, %v141
    %v158 = vrot.slane %v157, 4
    %v159 = vadd.f32 %v157, %v158
    %v160 = vrot.slane %v159, 2
    %v161 = vadd.f32 %v159, %v160
    %v162 = vrot.slane %v161, 1
    %v163 = vadd.f32 %v161, %v162
    %v164 = vadd.f32 %v154, %v163
    %165 = vst [vmem:[#allocation8] sm:$0x1] %v164
    // Predicated region
    $region22: #{tpu_custom_call.1} parent=1 // pred_check
      _
    $region23: #{tpu_custom_call.1} parent=1 // pred_check_branch
      %167 = sbr.rel (0) target = $region25
    $region24: #{tpu_custom_call.1} parent=1 // pred_region
      %s169 = ssub.s32 128, 128
      %170 = vsyncadd [#allocation4], %s169
      %s172 = sshll.u32 [#allocation7], 4
      %s173 = int_to_ptr.vmem [resolvable:$true] %s172
      %175 = dma.vmem_to_hbm [thread:$0]  %s173, 128, %s2, [#allocation4]
    $region25: #{tpu_custom_call.1} parent=1 // pred_fallthru
      _
    // Predicated region
    $region26: #{tpu_custom_call.1} parent=1 // pred_check
      _
    $region27: #{tpu_custom_call.1} parent=1 // pred_check_branch
      %177 = sbr.rel (0) target = $region29
    $region28: #{tpu_custom_call.1} parent=1 // pred_region
      %s179 = ssub.s32 128, 128
      %180 = vsyncadd [#allocation9], %s179
      %s182 = sshll.u32 [#allocation8], 4
      %s183 = int_to_ptr.vmem [resolvable:$true] %s182
      %185 = dma.vmem_to_hbm [thread:$0]  %s183, 128, %s3, [#allocation9]
    $region29: #{tpu_custom_call.1} parent=1 // pred_fallthru
      _
    // Predicated region
    $region30: #{tpu_custom_call.1} parent=1 // pred_check
      _
    $region31: #{tpu_custom_call.1} parent=1 // pred_check_branch
      %187 = sbr.rel (0) target = $region33
    $region32: #{tpu_custom_call.1} parent=1 // pred_region
      %188 = dma.done [#allocation4], 128
    $region33: #{tpu_custom_call.1} parent=1 // pred_fallthru
      _
    // Predicated region
    $region34: #{tpu_custom_call.1} parent=1 // pred_check
      _
    $region35: #{tpu_custom_call.1} parent=1 // pred_check_branch
      %190 = sbr.rel (0) target = $region37
    $region36: #{tpu_custom_call.1} parent=1 // pred_region
      %191 = dma.done [#allocation9], 128
    $region37: #{tpu_custom_call.1} parent=1 // pred_fallthru
      _
    %192 = vsyncpa [#allocation3], 1
    %193 = vsyncpa [#allocation6], 1
    %194 = vsyncpa [#allocation4], 1
    %195 = vsyncpa [#allocation9], 1

</llo_original>
